<compile_context>
chip_gen: v7x
topology: tpu7x:2x2x1
jax: 0.10.0
libtpu: 0.0.40
codegen_flags: <defaults>
</compile_context>

<pallas_src>
import math

import jax
import jax.numpy as jnp
from jax.experimental import pallas as pl
from jax.experimental.pallas import tpu as pltpu

_LANE = 128
_FAST_PATH_BYTES = 1 << 20            # below this, plain XLA round is faster
_BLOCK_CAP_BYTES = 8 * 1024 * 1024    # per-block (padded) cap
_VMEM_LIMIT_BYTES = 40 * 1024 * 1024  # 4 double-buffers of the cap + headroom


def _ste_round_kernel(x_ref, o_ref):
    # Forward of the straight-through estimator: round (half-to-even, same
    # semantics as torch.round / jnp.round).  Keep the body a single
    # round+store: the kernel is HBM-bound on every TPU generation.
    o_ref[...] = jnp.round(x_ref[...])


def _sublane_pack(dtype) -> int:
    """Native sublane packing for the dtype (rows per full vreg tile)."""
    itemsize = jnp.dtype(dtype).itemsize
    return {4: 8, 2: 16, 1: 32}.get(itemsize, 8)


def _cdiv(a, b):
    return -(-a // b)


def _device_block_target():
    """(target block bytes, is_v7x) — generation-aware sizing."""
    try:
        kind = jax.devices()[0].device_kind.lower()
    except Exception:  # pragma: no cover - defensive
        kind = ""
    is_v7 = ("v7" in kind) or ("7x" in kind)
    # v7x: ~3.2 TB/s HBM -> use ~4 MiB blocks; v5e/v6e: 2 MiB is already
    # ~85% of the HBM roofline and fits every default scoped-VMEM budget.
    return (4 * 1024 * 1024 if is_v7 else 2 * 1024 * 1024), is_v7


def _padded_block_bytes(bl, br, bc, sub, itemsize):
    """VMEM footprint of one block after (sublane, lane) tile padding."""
    return bl * _cdiv(br, sub) * sub * _cdiv(bc, _LANE) * _LANE * itemsize


def _ste_round_pallas(x):
    """Elementwise round, blocked over the natural (layout-preserving) shape."""
    if x.ndim == 0:
        return jnp.round(x)

    orig_shape = x.shape
    dtype = x.dtype
    itemsize = jnp.dtype(dtype).itemsize
    sub = _sublane_pack(dtype)
    target, is_v7 = _device_block_target()

    # Collapse leading dims only (the tiled (sublane, lane) layout of the last
    # two dims is untouched -> metadata-only reshape, no relayout copies).
    if x.ndim >= 3:
        lead = math.prod(orig_shape[:-2])
        R, C = orig_shape[-2], orig_shape[-1]
    elif x.ndim == 2:
        lead, (R, C) = 1, orig_shape
    else:  # 1-D
        lead, R, C = 1, 1, orig_shape[0]
    x3 = jnp.reshape(x, (lead, R, C))

    # ---- Block sizing ----------------------------------------------------
    # Lane dim: only split when it is 128-aligned (ragged lane blocks would
    # require a relayout); otherwise take it whole and let padding happen
    # inside the vreg tiles.
    if C % _LANE == 0:
        max_c = max(_LANE, (target // (sub * itemsize)) // _LANE * _LANE)
        block_c = min(C, max_c)
    else:
        block_c = C
    pc = _cdiv(block_c, _LANE) * _LANE
    prow = pc * itemsize

    # Sublane dim: multiples of the dtype's native packing, or the full dim.
    if block_c == C:
        rows_target = max(1, target // prow)
        if rows_target >= R or R <= sub:
            block_r = R
        else:
            block_r = max(sub, (rows_target // sub) * sub)
    else:
        block_r = R if R <= sub else sub
    pr = _cdiv(block_r, sub) * sub

    # Leading dim: grow the block toward the byte target only when the whole
    # (R, C) face already fits.
    if block_c == C and block_r == R:
        block_lead = int(min(lead, max(1, target // (pr * prow))))
    else:
        block_lead = 1

    # Safety net: never let one block (after tile padding) blow VMEM.
    def _fits(bl, br, bc):
        return _padded_block_bytes(bl, br, bc, sub, itemsize) <= _BLOCK_CAP_BYTES

    if not _fits(block_lead, block_r, block_c):
        block_lead = 1
        if not _fits(1, block_r, block_c):
            block_r = R if R <= sub else sub
            if not _fits(1, block_r, block_c):
                # TODO(synk): enormous non-128-aligned trailing dim; tiling it
                # without a relayout is not possible — let XLA stream it.
                return jnp.round(x)

    g1 = _cdiv(R, block_r)
    g2 = _cdiv(C, block_c)
    # v7x megacore: when the leading axis is the only split axis, prefer an
    # even step count so both TensorCores get equal work.
    if is_v7 and g1 == 1 and g2 == 1 and block_lead < lead:
        g0 = _cdiv(lead, block_lead)
        if g0 > 1 and g0 % 2 == 1:
            block_lead = _cdiv(lead, g0 + 1)
    g0 = _cdiv(lead, block_lead)

    out3 = pl.pallas_call(
        _ste_round_kernel,
        out_shape=jax.ShapeDtypeStruct((lead, R, C), dtype),
        grid_spec=pltpu.PrefetchScalarGridSpec(
            num_scalar_prefetch=0,
            grid=(g0, g1, g2),
            in_specs=[pl.BlockSpec((block_lead, block_r, block_c),
                                   lambda i, j, k: (i, j, k))],
            out_specs=pl.BlockSpec((block_lead, block_r, block_c),
                                   lambda i, j, k: (i, j, k)),
        ),
        compiler_params=pltpu.CompilerParams(
            dimension_semantics=("parallel", "parallel", "parallel"),
            vmem_limit_bytes=_VMEM_LIMIT_BYTES,
        ),
    )(x3)

    return jnp.reshape(out3, orig_shape)


def _ste_forward(x):
    if not jnp.issubdtype(x.dtype, jnp.floating):
        return x  # round is the identity on integer tensors
    # TODO(synk): fp8 inputs go through jnp.round's upcast/downcast lowering;
    # tie behavior vs. the torch reference has not been separately verified.
    if x.ndim == 0 or x.size * jnp.dtype(x.dtype).itemsize < _FAST_PATH_BYTES:
        # Tiny tensors: pallas_call launch cost dominates; plain XLA fusion
        # is faster and copy-free.
        return jnp.round(x)
    return _ste_round_pallas(x)


@jax.custom_vjp
def straight_through_estimator(x):
    """StraightThroughEstimator.forward: round with identity gradient."""
    return _ste_forward(x)


def _ste_vjp_fwd(x):
    return _ste_forward(x), None


def _ste_vjp_bwd(_, g):
    return (g,)  # straight-through: pass the gradient unchanged


straight_through_estimator.defvjp(_ste_vjp_fwd, _ste_vjp_bwd)


if __name__ == "__main__":
    k0, k1 = jax.random.split(jax.random.PRNGKey(0))
    # NCHW input, small shapes: batch=2, channels=4, spatial=16.
    # Trailing dim 16 is lane-unaligned -> exercises the natural-shape path.
    x = jax.random.normal(k0, (2, 4, 16, 16), dtype=jnp.float32) * 3.0
    y_ref = jnp.round(x)

    # Run the Pallas kernel path directly (the public wrapper would take the
    # small-input XLA fast path at this size).
    y = jax.block_until_ready(_ste_round_pallas(x))
    assert y.shape == x.shape and y.dtype == x.dtype
    assert bool(jnp.all(y == y_ref))

    # Lane-aligned shape exercises the collapsed-leading-dims / aligned path.
    x2 = jax.random.normal(k1, (4, 8, 128), dtype=jnp.float32) * 3.0
    y2 = jax.block_until_ready(_ste_round_pallas(x2))
    assert bool(jnp.all(y2 == jnp.round(x2)))

    # Full module forward + straight-through (identity) gradient.
    y3 = jax.block_until_ready(straight_through_estimator(x))
    assert bool(jnp.all(y3 == y_ref))
    g = jax.grad(lambda t: jnp.sum(straight_through_estimator(t)))(x)
    assert bool(jnp.all(g == 1.0))

    print("KERNEL_OK")
</pallas_src>

<mosaic_0001>
module attributes {stable_mosaic.version = 11 : i64} {
  func.func @_ste_round_kernel(%arg0: i32, %arg1: i32, %arg2: i32, %arg3: memref<8x16x16xf32, #tpu.memory_space<vmem>>, %arg4: memref<8x16x16xf32, #tpu.memory_space<vmem>>) attributes {dimension_semantics = [#tpu.dimension_semantics<parallel>, #tpu.dimension_semantics<parallel>, #tpu.dimension_semantics<parallel>], iteration_bounds = array<i64: 1, 1, 1>, scalar_prefetch = 0 : i64, scratch_operands = 0 : i64, tpu.core_type = #tpu.core_type<tc>, window_params = [{transform_indices = @transform_0, window_bounds = array<i64: 8, 16, 16>}, {transform_indices = @transform_1, window_bounds = array<i64: 8, 16, 16>}]} {
    %c0 = arith.constant 0 : index
    %c0_0 = arith.constant 0 : index
    %c0_1 = arith.constant 0 : index
    %0 = vector.load %arg3[%c0, %c0_0, %c0_1] : memref<8x16x16xf32, #tpu.memory_space<vmem>>, vector<8x16x16xf32>
    %1 = math.roundeven %0 : vector<8x16x16xf32>
    %c0_2 = arith.constant 0 : index
    %c0_3 = arith.constant 0 : index
    %c0_4 = arith.constant 0 : index
    %2 = vector.load %arg4[%c0_2, %c0_3, %c0_4] : memref<8x16x16xf32, #tpu.memory_space<vmem>>, vector<8x16x16xf32>
    tpu.vector_store %arg4[%c0_2, %c0_3, %c0_4], %1 {strides = array<i32>} : memref<8x16x16xf32, #tpu.memory_space<vmem>>, vector<8x16x16xf32>,
    return
  }
  func.func @transform_0(%arg0: i32, %arg1: i32, %arg2: i32) -> (i32, i32, i32) {
    %c0_i32 = arith.constant 0 : i32
    return %arg0, %arg1, %arg2 : i32, i32, i32
  }
  func.func @transform_1(%arg0: i32, %arg1: i32, %arg2: i32) -> (i32, i32, i32) {
    %c0_i32 = arith.constant 0 : i32
    return %arg0, %arg1, %arg2 : i32, i32, i32
  }
}

</mosaic_0001>

<llo_original>
// kernel: tpu_custom_call.1
$region0: #{tpu_custom_call.1}
  #allocation0 [shape = 'u32[]', space=smem, size = 0x4, offset = 0x4, fixed_abs, tag = 'smem constant byte address 0x4 - core index']
  #allocation1 [shape = 'u32[144,128]{1,0:T(1,128)}', space=vmem, size = 0x12000, scoped, tag = 'internal scratch']
  %s0 = inlined_call_operand.hbm [shape: f32[8,16,16], index: 0, kind: input, shape index: {}]
  %s1 = inlined_call_operand.hbm [shape: f32[8,16,16], index: 1, kind: output, shape index: {}]
  %s2 = sld [smem:[#allocation0]]
  $region18: #{tpu_custom_call.1} parent=0
    _
  %s4 = ssub.s32 1, %s2
  %s5 = scalar_select 0, %s4, %s2
  $region1: #{tpu_custom_call.1} parent=0
    #allocation2 [shape = 'u8[65536]{0}', space=vmem, size = 0x10000, scoped, tag = 'input window, operand 0, single buffered']
    #allocation3 [shape = 's32[1]{0}', space=sflag, size = 0x4, scoped, tag = 'scoped memory for tpu_custom_call.1']
    #allocation4 [shape = 's32[1]{0}', space=sflag, size = 0x4, scoped, tag = 'scoped memory for tpu_custom_call.1']
    #allocation5 [shape = 'u8[65536]{0}', space=vmem, size = 0x10000, scoped, tag = 'output window, operand 0, single buffered']
    %6 = vsyncpa [#allocation3], 0
    %7 = vsyncpa [#allocation4], 0
    // Predicated region
    $region2: #{tpu_custom_call.1} parent=1 // pred_check
      _
    $region3: #{tpu_custom_call.1} parent=1 // pred_check_branch
      %9 = sbr.rel (0) target = $region5
    $region4: #{tpu_custom_call.1} parent=1 // pred_region
      %s11 = ssub.s32 2048, 2048
      %12 = vsyncadd [#allocation3], %s11
      %s13 = sshll.u32 [#allocation2], 4
      %s14 = int_to_ptr.vmem [resolvable:$true] %s13
      %19 = dma.hbm_to_vmem [thread:$0]  %s0, 2048, %s14, [#allocation3], 128, 128, 8
    $region5: #{tpu_custom_call.1} parent=1 // pred_fallthru
      _
    // Predicated region
    $region6: #{tpu_custom_call.1} parent=1 // pred_check
      _
    $region7: #{tpu_custom_call.1} parent=1 // pred_check_branch
      %21 = sbr.rel (0) target = $region9
    $region8: #{tpu_custom_call.1} parent=1 // pred_region
      %22 = dma.done [#allocation3], 2048
    $region9: #{tpu_custom_call.1} parent=1 // pred_fallthru
      _
    %v23 = vld [vmem:[#allocation2] sm:$0xff]
    %v24 = vld [vmem:[#allocation2 + $0x8] sm:$0xff]
    %v25 = vld [vmem:[#allocation2 + $0x10] sm:$0xff]
    %v26 = vld [vmem:[#allocation2 + $0x18] sm:$0xff]
    %v27 = vld [vmem:[#allocation2 + $0x20] sm:$0xff]
    %v28 = vld [vmem:[#allocation2 + $0x28] sm:$0xff]
    %v29 = vld [vmem:[#allocation2 + $0x30] sm:$0xff]
    %v30 = vld [vmem:[#allocation2 + $0x38] sm:$0xff]
    %v31 = vld [vmem:[#allocation2 + $0x40] sm:$0xff]
    %v32 = vld [vmem:[#allocation2 + $0x48] sm:$0xff]
    %v33 = vld [vmem:[#allocation2 + $0x50] sm:$0xff]
    %v34 = vld [vmem:[#allocation2 + $0x58] sm:$0xff]
    %v35 = vld [vmem:[#allocation2 + $0x60] sm:$0xff]
    %v36 = vld [vmem:[#allocation2 + $0x68] sm:$0xff]
    %v37 = vld [vmem:[#allocation2 + $0x70] sm:$0xff]
    %v38 = vld [vmem:[#allocation2 + $0x78] sm:$0xff]
    %v39 = vround.ne.pseudo %v23
    %v40 = vround.ne.pseudo %v24
    %v41 = vround.ne.pseudo %v25
    %v42 = vround.ne.pseudo %v26
    %v43 = vround.ne.pseudo %v27
    %v44 = vround.ne.pseudo %v28
    %v45 = vround.ne.pseudo %v29
    %v46 = vround.ne.pseudo %v30
    %v47 = vround.ne.pseudo %v31
    %v48 = vround.ne.pseudo %v32
    %v49 = vround.ne.pseudo %v33
    %v50 = vround.ne.pseudo %v34
    %v51 = vround.ne.pseudo %v35
    %v52 = vround.ne.pseudo %v36
    %v53 = vround.ne.pseudo %v37
    %v54 = vround.ne.pseudo %v38
    %vm55 = vcmask 130048
    %56 = vst.msk [vmem:[#allocation5] sm:$0xff] %vm55, %v39
    %57 = vst.msk [vmem:[#allocation5 + $0x8] sm:$0xff] %vm55, %v40
    %58 = vst.msk [vmem:[#allocation5 + $0x10] sm:$0xff] %vm55, %v41
    %59 = vst.msk [vmem:[#allocation5 + $0x18] sm:$0xff] %vm55, %v42
    %60 = vst.msk [vmem:[#allocation5 + $0x20] sm:$0xff] %vm55, %v43
    %61 = vst.msk [vmem:[#allocation5 + $0x28] sm:$0xff] %vm55, %v44
    %62 = vst.msk [vmem:[#allocation5 + $0x30] sm:$0xff] %vm55, %v45
    %63 = vst.msk [vmem:[#allocation5 + $0x38] sm:$0xff] %vm55, %v46
    %64 = vst.msk [vmem:[#allocation5 + $0x40] sm:$0xff] %vm55, %v47
    %65 = vst.msk [vmem:[#allocation5 + $0x48] sm:$0xff] %vm55, %v48
    %66 = vst.msk [vmem:[#allocation5 + $0x50] sm:$0xff] %vm55, %v49
    %67 = vst.msk [vmem:[#allocation5 + $0x58] sm:$0xff] %vm55, %v50
    %68 = vst.msk [vmem:[#allocation5 + $0x60] sm:$0xff] %vm55, %v51
    %69 = vst.msk [vmem:[#allocation5 + $0x68] sm:$0xff] %vm55, %v52
    %70 = vst.msk [vmem:[#allocation5 + $0x70] sm:$0xff] %vm55, %v53
    %71 = vst.msk [vmem:[#allocation5 + $0x78] sm:$0xff] %vm55, %v54
    // Predicated region
    $region10: #{tpu_custom_call.1} parent=1 // pred_check
      _
    $region11: #{tpu_custom_call.1} parent=1 // pred_check_branch
      %73 = sbr.rel (0) target = $region13
    $region12: #{tpu_custom_call.1} parent=1 // pred_region
      %s75 = ssub.s32 2048, 2048
      %76 = vsyncadd [#allocation4], %s75
      %s77 = sshll.u32 [#allocation5], 4
      %s78 = int_to_ptr.vmem [resolvable:$true] %s77
      %83 = dma.vmem_to_hbm [thread:$0]  %s78, 2048, %s1, [#allocation4], 128, 128, 8
    $region13: #{tpu_custom_call.1} parent=1 // pred_fallthru
      _
    // Predicated region
    $region14: #{tpu_custom_call.1} parent=1 // pred_check
      _
    $region15: #{tpu_custom_call.1} parent=1 // pred_check_branch
      %85 = sbr.rel (0) target = $region17
    $region16: #{tpu_custom_call.1} parent=1 // pred_region
      %86 = dma.done [#allocation4], 2048
    $region17: #{tpu_custom_call.1} parent=1 // pred_fallthru
      _
    %87 = vsyncpa [#allocation3], 1
    %88 = vsyncpa [#allocation4], 1

</llo_original>
